<compile_context>
chip_gen: v6e
topology: v6e:2x2x1
jax: 0.10.0
libtpu: 0.0.40
codegen_flags: <defaults>
</compile_context>

<pallas_src>
import functools

import jax
import jax.numpy as jnp
from jax.experimental import pallas as pl
from jax.experimental.pallas import tpu as pltpu


def _round_up(x, m):
    return ((x + m - 1) // m) * m


def _focal_pow(base, gamma):
    """(base)**gamma with base >= 0, specialised to avoid jnp.power when possible."""
    g = float(gamma)
    if g == 0.5:
        return jnp.sqrt(base)
    if g.is_integer():
        gi = int(g)
        if gi == 0:
            return jnp.ones_like(base)
        out = base
        for _ in range(gi - 1):
            out = out * base
        return out
    return jnp.power(base, g)


def focal_loss_kernel(x_ref, t_ref, psum_ref, *, gamma, n_total, tile_n):
    pid = pl.program_id(0)

    x = x_ref[...].astype(jnp.float32)                  # (tile_n, C)
    t = t_ref[...]                                      # (tile_n, 1) int32

    # Numerically stable log-sum-exp over the class (lane) axis.
    m = jnp.max(x, axis=-1, keepdims=True)              # (tile_n, 1)
    z = x - m                                           # (tile_n, C), <= 0
    lse = jnp.log(jnp.sum(jnp.exp(z), axis=-1, keepdims=True))  # (tile_n, 1)

    # Gather the target-class shifted logit via one-hot mask-sum (no dense focal term).
    cls_idx = jax.lax.broadcasted_iota(jnp.int32, x.shape, 1)   # (tile_n, C)
    onehot = (cls_idx == t).astype(jnp.float32)
    z_t = jnp.sum(z * onehot, axis=-1, keepdims=True)           # (tile_n, 1)

    log_pt = z_t - lse                                  # log p_target, (tile_n, 1)
    pt = jnp.exp(log_pt)
    focal_w = _focal_pow(jnp.maximum(1.0 - pt, 0.0), gamma)
    contrib = focal_w * log_pt                          # (tile_n, 1)

    # Mask rows past the true N (last partial tile reads padded/garbage data).
    row = jax.lax.broadcasted_iota(jnp.int32, (tile_n, 1), 0) + pid * tile_n
    contrib = jnp.where(row < n_total, contrib, 0.0)

    psum = jnp.sum(contrib)
    # Lane-dense (8,128) broadcast store of this block's partial sum.
    psum_ref[...] = jnp.broadcast_to(psum, psum_ref.shape).astype(jnp.float32)


def focal_loss(logits, target, gamma=0.5, *, tile_n=None):
    """Pallas implementation of FocalLoss.forward (weight=None, reduction='mean')."""
    N, C = logits.shape

    if tile_n is None:
        # Aim for a multi-MiB logits tile (double-buffered by BlockSpec), 8-aligned.
        bytes_per_row = max(C * jnp.dtype(logits.dtype).itemsize, 1)
        rows = max(8, ((8 * 1024 * 1024) // bytes_per_row) // 8 * 8)
        tile_n = int(min(rows, _round_up(N, 8), 2048))
    tile_n = int(tile_n)

    grid_n = pl.cdiv(N, tile_n)
    t = target.astype(jnp.int32).reshape(N, 1)

    partial = pl.pallas_call(
        functools.partial(focal_loss_kernel, gamma=gamma, n_total=N, tile_n=tile_n),
        out_shape=jax.ShapeDtypeStruct((grid_n * 8, 128), jnp.float32),
        grid=(grid_n,),
        in_specs=[
            pl.BlockSpec((tile_n, C), lambda i: (i, 0)),
            pl.BlockSpec((tile_n, 1), lambda i: (i, 0)),
        ],
        out_specs=pl.BlockSpec((8, 128), lambda i: (i, 0)),
        compiler_params=pltpu.CompilerParams(
            dimension_semantics=("parallel",),
            vmem_limit_bytes=32 * 1024 * 1024,
        ),
    )(logits, t)

    # One partial sum per grid block (broadcast across its (8,128) tile).
    psums = partial[0::8, 0]
    return -jnp.sum(psums) / N


def focal_loss_ref(logits, target, gamma=0.5):
    """Pure-JAX reference mirroring the PyTorch forward."""
    log_prob = jax.nn.log_softmax(logits.astype(jnp.float32), axis=-1)
    prob = jnp.exp(log_prob)
    focal = jnp.power(1.0 - prob, gamma) * log_prob
    picked = jnp.take_along_axis(focal, target[:, None].astype(jnp.int32), axis=-1)[:, 0]
    return -jnp.mean(picked)


if __name__ == "__main__":
    key = jax.random.PRNGKey(0)
    k_x, k_t, k_x2, k_t2 = jax.random.split(key, 4)

    # Small case: single tile.
    N, C = 8, 32
    logits = jax.random.normal(k_x, (N, C), dtype=jnp.float32)
    target = jax.random.randint(k_t, (N,), 0, C, dtype=jnp.int32)
    loss = jax.block_until_ready(focal_loss(logits, target, gamma=0.5))
    ref = focal_loss_ref(logits, target, gamma=0.5)
    assert jnp.allclose(loss, ref, rtol=1e-5, atol=1e-5), (loss, ref)

    # Exercise the grid + padded-row masking (N not a multiple of the tile).
    N2, C2 = 50, 40
    logits2 = jax.random.normal(k_x2, (N2, C2), dtype=jnp.float32)
    target2 = jax.random.randint(k_t2, (N2,), 0, C2, dtype=jnp.int32)
    loss2 = jax.block_until_ready(focal_loss(logits2, target2, gamma=0.5, tile_n=16))
    ref2 = focal_loss_ref(logits2, target2, gamma=0.5)
    assert jnp.allclose(loss2, ref2, rtol=1e-5, atol=1e-5), (loss2, ref2)

    print("KERNEL_OK")
</pallas_src>

<mosaic_0001>
module attributes {stable_mosaic.version = 11 : i64} {
  func.func @focal_loss_kernel(%arg0: i32, %arg1: memref<8x32xf32, #tpu.memory_space<vmem>>, %arg2: memref<8x1xi32, #tpu.memory_space<vmem>>, %arg3: memref<8x128xf32, #tpu.memory_space<vmem>>) attributes {dimension_semantics = [#tpu.dimension_semantics<parallel>], iteration_bounds = array<i64: 1>, scalar_prefetch = 0 : i64, scratch_operands = 0 : i64, tpu.core_type = #tpu.core_type<tc>, window_params = [{transform_indices = @transform_0, window_bounds = array<i64: 8, 32>}, {transform_indices = @transform_1, window_bounds = array<i64: 8, 1>}, {transform_indices = @transform_2, window_bounds = array<i64: 8, 128>}]} {
    %c0 = arith.constant 0 : index
    %c0_0 = arith.constant 0 : index
    %0 = vector.load %arg1[%c0, %c0_0] : memref<8x32xf32, #tpu.memory_space<vmem>>, vector<8x32xf32>
    %c0_1 = arith.constant 0 : index
    %c0_2 = arith.constant 0 : index
    %1 = vector.load %arg2[%c0_1, %c0_2] : memref<8x1xi32, #tpu.memory_space<vmem>>, vector<8x1xi32>
    %cst = arith.constant dense<0xFF800000> : vector<8xf32>
    %2 = vector.multi_reduction <maximumf>, %0, %cst [1] : vector<8x32xf32> to vector<8xf32>
    %3 = vector.shape_cast %2 : vector<8xf32> to vector<8x1xf32>
    %4 = vector.broadcast %3 : vector<8x1xf32> to vector<8x32xf32>
    %5 = arith.subf %0, %4 : vector<8x32xf32>
    %6 = math.exp %5 : vector<8x32xf32>
    %cst_3 = arith.constant dense<0.000000e+00> : vector<8xf32>
    %7 = vector.multi_reduction <add>, %6, %cst_3 [1] : vector<8x32xf32> to vector<8xf32>
    %8 = vector.shape_cast %7 : vector<8xf32> to vector<8x1xf32>
    %9 = math.log %8 : vector<8x1xf32>
    %10 = tpu.iota {dimensions = array<i32: 1>} : vector<8x32xi32>
    %11 = vector.broadcast %1 : vector<8x1xi32> to vector<8x32xi32>
    %12 = arith.cmpi eq, %10, %11 : vector<8x32xi32>
    %13 = arith.extui %12 : vector<8x32xi1> to vector<8x32xi32>
    %14 = arith.sitofp %13 : vector<8x32xi32> to vector<8x32xf32>
    %15 = arith.mulf %5, %14 : vector<8x32xf32>
    %cst_4 = arith.constant dense<0.000000e+00> : vector<8xf32>
    %16 = vector.multi_reduction <add>, %15, %cst_4 [1] : vector<8x32xf32> to vector<8xf32>
    %17 = vector.shape_cast %16 : vector<8xf32> to vector<8x1xf32>
    %18 = arith.subf %17, %9 : vector<8x1xf32>
    %19 = math.exp %18 : vector<8x1xf32>
    %cst_5 = arith.constant 1.000000e+00 : f32
    %20 = vector.broadcast %cst_5 : f32 to vector<8x1xf32>
    %21 = arith.subf %20, %19 : vector<8x1xf32>
    %cst_6 = arith.constant 0.000000e+00 : f32
    %22 = vector.broadcast %cst_6 : f32 to vector<8x1xf32>
    %23 = arith.maximumf %21, %22 : vector<8x1xf32>
    %24 = math.sqrt %23 : vector<8x1xf32>
    %25 = arith.mulf %24, %18 : vector<8x1xf32>
    %26 = tpu.iota {dimensions = array<i32: 0>} : vector<8x1xi32>
    %c8_i32 = arith.constant 8 : i32
    %27 = arith.muli %arg0, %c8_i32 : i32
    %28 = vector.broadcast %27 : i32 to vector<8x1xi32>
    %29 = arith.addi %26, %28 : vector<8x1xi32>
    %c8_i32_7 = arith.constant 8 : i32
    %30 = vector.broadcast %c8_i32_7 : i32 to vector<8x1xi32>
    %31 = arith.cmpi slt, %29, %30 : vector<8x1xi32>
    %cst_8 = arith.constant 0.000000e+00 : f32
    %32 = vector.broadcast %cst_8 : f32 to vector<8x1xf32>
    %33 = arith.select %31, %25, %32 : vector<8x1xi1>, vector<8x1xf32>
    %34 = vector.shape_cast %33 : vector<8x1xf32> to vector<1x8x1xf32>
    %cst_9 = arith.constant dense<0.000000e+00> : vector<1xf32>
    %35 = vector.multi_reduction <add>, %34, %cst_9 [1, 2] : vector<1x8x1xf32> to vector<1xf32>
    %36 = vector.shape_cast %35 : vector<1xf32> to vector<1x1x1xf32>
    %37 = vector.extract %36[0, 0, 0] : f32 from vector<1x1x1xf32>
    %38 = vector.broadcast %37 : f32 to vector<8x128xf32>
    %c0_10 = arith.constant 0 : index
    %c0_11 = arith.constant 0 : index
    %39 = vector.load %arg3[%c0_10, %c0_11] : memref<8x128xf32, #tpu.memory_space<vmem>>, vector<8x128xf32>
    tpu.vector_store %arg3[%c0_10, %c0_11], %38 {strides = array<i32>} : memref<8x128xf32, #tpu.memory_space<vmem>>, vector<8x128xf32>,
    return
  }
  func.func @transform_0(%arg0: i32) -> (i32, i32) {
    %c0_i32 = arith.constant 0 : i32
    %c0_i32_0 = arith.constant 0 : i32
    return %arg0, %c0_i32 : i32, i32
  }
  func.func @transform_1(%arg0: i32) -> (i32, i32) {
    %c0_i32 = arith.constant 0 : i32
    %c0_i32_0 = arith.constant 0 : i32
    return %arg0, %c0_i32 : i32, i32
  }
  func.func @transform_2(%arg0: i32) -> (i32, i32) {
    %c0_i32 = arith.constant 0 : i32
    %c0_i32_0 = arith.constant 0 : i32
    return %arg0, %c0_i32 : i32, i32
  }
}

</mosaic_0001>

<llo_original>
// kernel: tpu_custom_call.1
$region0: #{tpu_custom_call.1}
  #allocation0 [shape = 'u32[]', space=smem, size = 0x4, offset = 0x4, fixed_abs, tag = 'smem constant byte address 0x4 - core index']
  #allocation1 [shape = 'u32[144,128]{1,0:T(1,128)}', space=vmem, size = 0x12000, scoped, tag = 'internal scratch']
  %s0 = inlined_call_operand.vmem [shape: f32[8,32], index: 0, kind: input, shape index: {}]
  %s1 = inlined_call_operand.vmem [shape: s32[8,1], index: 1, kind: input, shape index: {}]
  %s2 = inlined_call_operand.hbm [shape: f32[8,128], index: 2, kind: output, shape index: {}]
  %s3 = sld [smem:[#allocation0]]
  $region18: #{tpu_custom_call.1} parent=0
    _
  %s5 = ssub.s32 1, %s3
  %s6 = scalar_select 0, %s5, %s3
  $region1: #{tpu_custom_call.1} parent=0
    #allocation2 [shape = 'u8[4096]{0}', space=vmem, size = 0x1000, scoped, tag = 'output window, operand 0, single buffered']
    #allocation3 [shape = 's32[1]{0}', space=sflag, size = 0x4, scoped, tag = 'scoped memory for tpu_custom_call.1']
    %7 = vsyncpa [#allocation3], 0
    // Predicated region
    $region2: #{tpu_custom_call.1} parent=1 // pred_check
      _
    $region3: #{tpu_custom_call.1} parent=1 // pred_check_branch
      %9 = sbr.rel (0) target = $region5
    $region4: #{tpu_custom_call.1} parent=1 // pred_region
      _
    $region5: #{tpu_custom_call.1} parent=1 // pred_fallthru
      _
    // Predicated region
    $region6: #{tpu_custom_call.1} parent=1 // pred_check
      _
    $region7: #{tpu_custom_call.1} parent=1 // pred_check_branch
      %11 = sbr.rel (0) target = $region9
    $region8: #{tpu_custom_call.1} parent=1 // pred_region
      _
    $region9: #{tpu_custom_call.1} parent=1 // pred_fallthru
      _
    %v12 = vld [vmem:[%s0] sm:$0xff]
    %v13 = vld [vmem:[%s1] sm:$0xff]
    %vm14 = vcmask 261120
    %v15 = vsel %vm14, %v12, -inf
    %16 = vmax.xlane.f32.xlu0 %v15
    %v17 = vpop.xlane.xlu0 %16
    %v18 = vsub.f32 %v12, %v17
    %v19 = vmul.f32 %v18, 1.442695
    %v20 = vpow.pop %v19
    %v21 = vsel %vm14, %v20, 0.0
    %22 = vadd.xlane.f32.xlu0 %v21
    %v23 = vpop.xlane.xlu0 %22
    %v24 = vlog2.pop %v23
    %v25 = vmul.f32 %v24, 0.6931472
    %v26 = vlaneseq
    %v27 = vand.u32 %v26, 127
    %28 = vset.pattern.permute.xlu0 0
    %29 = vperm.xlu0 %28, %v13
    %v30 = vpop.permute.xlu0 %29
    %vm31 = vcmp.eq.s32.totalorder %v27, %v30
    %v32 = vsel %vm31, 1, 0
    %v33 = vcvt.s32.f32 %v32
    %v34 = vmul.f32 %v18, %v33
    %v35 = vsel %vm14, %v34, 0.0
    %36 = vadd.xlane.f32.xlu0 %v35
    %v37 = vpop.xlane.xlu0 %36
    %v38 = vsub.f32 %v37, %v25
    %v39 = vmul.f32 %v38, 1.442695
    %v40 = vpow.pop %v39
    %v41 = vsub.f32 1.0, %v40
    %v42 = vmax.f32 %v41, 0.0
    %v43 = vrsqrt.pop %v42
    %v44 = vmul.f32 %v42, %v43
    %vm45 = vcmp.eq.f32.partialorder %v42, inf
    %v46 = vsel %vm45, %v42, %v44
    %vm47 = vcmp.eq.f32.partialorder %v42, 0.0
    %v48 = vand.u32 %v42, 2147483648
    %v49 = vsel %vm47, %v48, %v46
    %v50 = vmul.f32 %v49, %v38
    %v51 = vlaneseq
    %v52 = vshrl.u32 %v51, 7
    %s53 = smul.u32 0, 8
    %v54 = vstv %s53
    %v55 = vadd.s32 %v52, %v54
    %vm56 = vcmp.lt.s32.totalorder %v55, 8
    %v57 = vsel %vm56, %v50, 0.0
    %vm58 = vcmask 7168
    %v59 = vsel %vm58, %v57, 0.0
    %60 = vadd.xlane.f32.xlu0 %v59
    %v61 = vpop.xlane.xlu0 %60
    %v62 = vrot.slane %v61, 4
    %v63 = vadd.f32 %v61, %v62
    %v64 = vrot.slane %v63, 2
    %v65 = vadd.f32 %v63, %v64
    %v66 = vrot.slane %v65, 1
    %v67 = vadd.f32 %v65, %v66
    %s68 = vtos %v67
    %v69 = vstv %s68
    %70 = vst [vmem:[#allocation2] sm:$0xff] %v69
    // Predicated region
    $region10: #{tpu_custom_call.1} parent=1 // pred_check
      _
    $region11: #{tpu_custom_call.1} parent=1 // pred_check_branch
      %72 = sbr.rel (0) target = $region13
    $region12: #{tpu_custom_call.1} parent=1 // pred_region
      %s74 = ssub.s32 128, 128
      %75 = vsyncadd [#allocation3], %s74
      %s77 = sshll.u32 [#allocation2], 4
      %s78 = int_to_ptr.vmem [resolvable:$true] %s77
      %80 = dma.vmem_to_hbm [thread:$0]  %s78, 128, %s2, [#allocation3]
    $region13: #{tpu_custom_call.1} parent=1 // pred_fallthru
      _
    // Predicated region
    $region14: #{tpu_custom_call.1} parent=1 // pred_check
      _
    $region15: #{tpu_custom_call.1} parent=1 // pred_check_branch
      %82 = sbr.rel (0) target = $region17
    $region16: #{tpu_custom_call.1} parent=1 // pred_region
      %83 = dma.done [#allocation3], 128
    $region17: #{tpu_custom_call.1} parent=1 // pred_fallthru
      _
    %84 = vsyncpa [#allocation3], 1

</llo_original>
